<compile_context>
chip_gen: v6e
topology: v6e:2x2x1
jax: 0.10.0
libtpu: 0.0.40
codegen_flags: <defaults>
</compile_context>

<pallas_src>
import functools

import jax
import jax.numpy as jnp
from jax.experimental import pallas as pl
from jax.experimental.pallas import tpu as pltpu


# Lane-dense slab widths (multiples of 128 -> unmasked full-lane vst).
_SLAB_WIDTHS = (2048, 1024, 512, 256, 128)
_DEFAULT_WIDTH = 512

# Below this element count a pallas_call is pure overhead; plain func(x) is
# both faster and, by definition, the module's semantics.
_MIN_PALLAS_ELEMS = 1024

# Ragged inputs whose single-block padded VMEM footprint (in+out) is below this
# run as one full-array block with zero extra HBM passes.
_SMALL_SINGLE_BLOCK_BYTES = 8 << 20


def _sublane_multiple(dtype):
    # Packing-aware minimum sublane count: f32 -> 8, bf16/f16 -> 16, int8/fp8 -> 32.
    itemsize = jnp.dtype(dtype).itemsize
    return {4: 8, 2: 16, 1: 32}.get(itemsize, 8)


def _round_up(v, m):
    return -(-v // m) * m


@functools.lru_cache(maxsize=None)
def _memory_budget():
    """Returns (per-step in+out byte target, vmem_limit_bytes) per TPU generation."""
    try:
        vmem_cap = int(pltpu.get_tpu_info().vmem_capacity_bytes)
    except Exception:
        try:
            kind = jax.devices()[0].device_kind.lower()
            vmem_cap = (64 << 20) if "v7" in kind else (128 << 20)
        except Exception:
            vmem_cap = 64 << 20  # conservative (v7x per-TC VMEM)
    if vmem_cap >= (96 << 20):
        # v5e / v6e: 128 MiB physical VMEM, ~1.3-1.4 TB/s HBM.
        # 4 MiB-in + 4 MiB-out per step keeps the fixed step overhead ~5%.
        return 8 << 20, 64 << 20
    # v7x: 64 MiB per-TC VMEM, ~3.2 TB/s per-TC HBM -> bigger steps amortize the
    # per-step overhead; 2 x (6+6) MiB double-buffered = 24 MiB < 48 MiB limit.
    return 12 << 20, 48 << 20


def _elementwise_probe(func, dtype):
    """Best-effort trace-time check that `func` acts elementwise."""
    try:
        probe = jnp.asarray([[0.25, -0.5], [1.5, 3.0]], dtype=dtype)
        whole = jnp.asarray(func(probe))
        if tuple(whole.shape) != tuple(probe.shape):
            return False
        parts = [jnp.asarray(func(probe[i:i + 1, j:j + 1])).reshape(())
                 for i in range(2) for j in range(2)]
        split = jnp.stack(parts).reshape(2, 2)
        return bool(jnp.allclose(whole.astype(jnp.float32),
                                 split.astype(jnp.float32),
                                 atol=1e-5, rtol=1e-5, equal_nan=True))
    except Exception:
        return False


def _elementwise_kernel(x_ref, o_ref, *, func):
    # Hot path: purely elementwise on the whole VMEM tile (VPU/EUP). Casts stay
    # in-kernel (v5e upcasts bf16 per-vreg; no extra HBM pass in the wrapper).
    o_ref[...] = func(x_ref[...]).astype(o_ref.dtype)


def _pallas_elementwise_2d(x2d, out_dtype, func, block_rows, vmem_limit):
    rows, width = x2d.shape
    grid = (pl.cdiv(rows, block_rows),)
    in_isz = jnp.dtype(x2d.dtype).itemsize
    out_isz = jnp.dtype(out_dtype).itemsize
    n = rows * width
    cost = pl.CostEstimate(flops=n, transcendentals=n,
                           bytes_accessed=n * (in_isz + out_isz))
    return pl.pallas_call(
        functools.partial(_elementwise_kernel, func=func),
        out_shape=jax.ShapeDtypeStruct((rows, width), out_dtype),
        grid=grid,
        in_specs=[pl.BlockSpec((block_rows, width), lambda i: (i, 0))],
        out_specs=pl.BlockSpec((block_rows, width), lambda i: (i, 0)),
        compiler_params=pltpu.CompilerParams(
            # "parallel" lets v7x shard the (>=2-step) grid across its 2 TCs;
            # neutral on single-TC v5e/v6e.
            dimension_semantics=("parallel",),
            vmem_limit_bytes=vmem_limit,
        ),
        cost_estimate=cost,
    )(x2d)


def make_wrapper_func(func):
    """JAX/Pallas equivalent of WrapperFunc(func): returns a callable y = func(x).

    Pallas fast path requires `func` to be elementwise and shape-preserving
    (verified by a trace-time probe); otherwise falls back to plain func(x),
    which matches the original module exactly.
    """
    elementwise_cache = {}

    def _is_elementwise(dtype):
        key = jnp.dtype(dtype).name
        if key not in elementwise_cache:
            elementwise_cache[key] = _elementwise_probe(func, dtype)
        return elementwise_cache[key]

    def forward(x):
        x = jnp.asarray(x)
        orig_shape = x.shape
        n = int(x.size)

        try:
            out_aval = jax.eval_shape(func, jax.ShapeDtypeStruct(x.shape, x.dtype))
            out_shape_ok = tuple(out_aval.shape) == tuple(orig_shape)
            out_dtype = out_aval.dtype
        except Exception:
            out_shape_ok, out_dtype = False, None

        if (not out_shape_ok) or n < _MIN_PALLAS_ELEMS or not _is_elementwise(x.dtype):
            # Non-elementwise / shape-changing / tiny inputs: plain JAX is
            # correct-by-construction (it IS the module semantics).
            return func(x)

        in_isz = jnp.dtype(x.dtype).itemsize
        out_isz = jnp.dtype(out_dtype).itemsize
        sublane = max(_sublane_multiple(x.dtype), _sublane_multiple(out_dtype))
        target_step_bytes, vmem_limit = _memory_budget()

        x_flat = jnp.ravel(x)  # contiguous reshape: bitcast, no HBM pass

        # --- aligned fast path: n is a multiple of a lane-dense slab width ----
        width = next((w for w in _SLAB_WIDTHS if n % w == 0), None)
        pad = 0

        if width is None:
            padded_single = 8 * _round_up(n, 128) * (in_isz + out_isz)
            if padded_single <= _SMALL_SINGLE_BLOCK_BYTES:
                # Ragged but small: one full-array (1, n) block. Zero extra HBM
                # passes (no pad/slice); masked tail lanes are free at this size.
                y = _pallas_elementwise_2d(x_flat.reshape(1, n), out_dtype, func,
                                           block_rows=1, vmem_limit=vmem_limit)
                return y.reshape(orig_shape)
            # Large & non-128-aligned (rare): pad up to a slab width.
            # TODO(synk): a 1-D blocked kernel over the unpadded flat array would
            # remove the pad/slice HBM passes; not done due to 1-D layout risk.
            width = _DEFAULT_WIDTH
            pad = _round_up(n, width) - n
            x_flat = jnp.pad(x_flat, (0, pad))

        rows = x_flat.size // width
        x2d = x_flat.reshape(rows, width)

        # Tile sizing: sublane multiple of BOTH dtypes; per-step (in+out) bytes
        # near the generation-specific target.
        tile_rows = max(
            sublane,
            (target_step_bytes // (width * (in_isz + out_isz))) // sublane * sublane,
        )

        if rows <= sublane:
            block_rows = rows  # single full block (block == array dims is legal)
        else:
            # Keep the grid >= 2 so the BlockSpec pipeline overlaps DMA with
            # compute and v7x's two TensorCores both get work.
            half_rows = _round_up(-(-rows // 2), sublane)
            block_rows = max(sublane, min(tile_rows, half_rows))

        y2d = _pallas_elementwise_2d(x2d, out_dtype, func, block_rows, vmem_limit)

        y_flat = y2d.reshape(-1)
        if pad:
            y_flat = y_flat[:n]
        return y_flat.reshape(orig_shape)

    return forward


if __name__ == "__main__":
    # Representative wrapped function: sigmoid (elementwise, EUP/VPU).
    wrapped = make_wrapper_func(jax.nn.sigmoid)

    # 1) NCHW input: batch=2, channels=4, spatial=16x16 (aligned path).
    x = jax.random.normal(jax.random.PRNGKey(0), (2, 4, 16, 16), dtype=jnp.float32)
    y = jax.block_until_ready(wrapped(x))
    y_ref = jax.nn.sigmoid(x)
    assert y.shape == x.shape and y.dtype == y_ref.dtype
    assert jnp.allclose(y, y_ref, atol=1e-6, rtol=1e-6)

    # 2) Ragged shape (n not a multiple of 128): zero-copy single-block path.
    x2 = jax.random.normal(jax.random.PRNGKey(1), (3, 5, 7, 11), dtype=jnp.float32)
    y2 = jax.block_until_ready(wrapped(x2))
    assert jnp.allclose(y2, jax.nn.sigmoid(x2), atol=1e-6, rtol=1e-6)

    # 3) bf16 input: dtype-aware sublane packing / native-dtype compute.
    xb = jax.random.normal(jax.random.PRNGKey(2), (2, 4, 16, 16), dtype=jnp.bfloat16)
    yb = jax.block_until_ready(wrapped(xb))
    assert jnp.allclose(yb.astype(jnp.float32),
                        jax.nn.sigmoid(xb).astype(jnp.float32),
                        atol=2e-2, rtol=2e-2)

    # 4) Larger aligned input: exercises the multi-step (grid >= 2) tiled path.
    x3 = jax.random.normal(jax.random.PRNGKey(3), (4, 64, 512), dtype=jnp.float32)
    y3 = jax.block_until_ready(wrapped(x3))
    assert jnp.allclose(y3, jax.nn.sigmoid(x3), atol=1e-6, rtol=1e-6)

    # 5) Dtype-changing elementwise func (bf16 -> f32): mixed-dtype tiling.
    affine = make_wrapper_func(lambda v: v.astype(jnp.float32) * 2.0 + 1.0)
    x4 = jax.random.normal(jax.random.PRNGKey(4), (4, 64, 512), dtype=jnp.bfloat16)
    y4 = jax.block_until_ready(affine(x4))
    assert y4.dtype == jnp.float32
    assert jnp.allclose(y4, x4.astype(jnp.float32) * 2.0 + 1.0, atol=1e-6, rtol=1e-6)

    # 6) Non-elementwise wrapped func: probe detects it, falls back to plain JAX.
    flipper = make_wrapper_func(lambda v: jnp.flip(v, axis=-1))
    y5 = jax.block_until_ready(flipper(x))
    assert jnp.array_equal(y5, jnp.flip(x, axis=-1))

    print("KERNEL_OK")
</pallas_src>

<mosaic_0001>
module attributes {stable_mosaic.version = 11 : i64} {
  func.func @_elementwise_kernel(%arg0: i32, %arg1: memref<1x2048xf32, #tpu.memory_space<vmem>>, %arg2: memref<1x2048xf32, #tpu.memory_space<vmem>>) attributes {dimension_semantics = [#tpu.dimension_semantics<parallel>], iteration_bounds = array<i64: 1>, scalar_prefetch = 0 : i64, scratch_operands = 0 : i64, tpu.core_type = #tpu.core_type<tc>, window_params = [{transform_indices = @transform_0, window_bounds = array<i64: 1, 2048>}, {transform_indices = @transform_1, window_bounds = array<i64: 1, 2048>}]} {
    %c0 = arith.constant 0 : index
    %c0_0 = arith.constant 0 : index
    %0 = vector.load %arg1[%c0, %c0_0] : memref<1x2048xf32, #tpu.memory_space<vmem>>, vector<1x2048xf32>
    %1 = arith.negf %0 : vector<1x2048xf32>
    %2 = math.exp %1 : vector<1x2048xf32>
    %cst = arith.constant 1.000000e+00 : f32
    %3 = vector.broadcast %cst : f32 to vector<1x2048xf32>
    %4 = arith.addf %3, %2 : vector<1x2048xf32>
    %5 = arith.divf %3, %4 : vector<1x2048xf32>
    %c0_1 = arith.constant 0 : index
    %c0_2 = arith.constant 0 : index
    %6 = vector.load %arg2[%c0_1, %c0_2] : memref<1x2048xf32, #tpu.memory_space<vmem>>, vector<1x2048xf32>
    tpu.vector_store %arg2[%c0_1, %c0_2], %5 {strides = array<i32>} : memref<1x2048xf32, #tpu.memory_space<vmem>>, vector<1x2048xf32>,
    return
  }
  func.func @transform_0(%arg0: i32) -> (i32, i32) {
    %c0_i32 = arith.constant 0 : i32
    %c0_i32_0 = arith.constant 0 : i32
    return %arg0, %c0_i32 : i32, i32
  }
  func.func @transform_1(%arg0: i32) -> (i32, i32) {
    %c0_i32 = arith.constant 0 : i32
    %c0_i32_0 = arith.constant 0 : i32
    return %arg0, %c0_i32 : i32, i32
  }
}

</mosaic_0001>

<llo_original>
// kernel: tpu_custom_call.1
$region0: #{tpu_custom_call.1}
  #allocation0 [shape = 'u32[]', space=smem, size = 0x4, offset = 0x4, fixed_abs, tag = 'smem constant byte address 0x4 - core index']
  #allocation1 [shape = 'u32[144,128]{1,0:T(1,128)}', space=vmem, size = 0x12000, scoped, tag = 'internal scratch']
  %s0 = inlined_call_operand.hbm [shape: f32[1,2048], index: 0, kind: input, shape index: {}]
  %s1 = inlined_call_operand.hbm [shape: f32[1,2048], index: 1, kind: output, shape index: {}]
  %s2 = sld [smem:[#allocation0]]
  $region18: #{tpu_custom_call.1} parent=0
    _
  %s4 = ssub.s32 1, %s2
  %s5 = scalar_select 0, %s4, %s2
  $region1: #{tpu_custom_call.1} parent=0
    #allocation2 [shape = 'u8[8192]{0}', space=vmem, size = 0x2000, scoped, tag = 'input window, operand 0, single buffered']
    #allocation3 [shape = 's32[1]{0}', space=sflag, size = 0x4, scoped, tag = 'scoped memory for tpu_custom_call.1']
    #allocation4 [shape = 's32[1]{0}', space=sflag, size = 0x4, scoped, tag = 'scoped memory for tpu_custom_call.1']
    #allocation5 [shape = 'u8[8192]{0}', space=vmem, size = 0x2000, scoped, tag = 'output window, operand 0, single buffered']
    %6 = vsyncpa [#allocation3], 0
    %7 = vsyncpa [#allocation4], 0
    // Predicated region
    $region2: #{tpu_custom_call.1} parent=1 // pred_check
      _
    $region3: #{tpu_custom_call.1} parent=1 // pred_check_branch
      %9 = sbr.rel (0) target = $region5
    $region4: #{tpu_custom_call.1} parent=1 // pred_region
      %s11 = ssub.s32 256, 256
      %12 = vsyncadd [#allocation3], %s11
      %s14 = sshll.u32 [#allocation2], 4
      %s15 = int_to_ptr.vmem [resolvable:$true] %s14
      %17 = dma.hbm_to_vmem [thread:$0]  %s0, 256, %s15, [#allocation3]
    $region5: #{tpu_custom_call.1} parent=1 // pred_fallthru
      _
    // Predicated region
    $region6: #{tpu_custom_call.1} parent=1 // pred_check
      _
    $region7: #{tpu_custom_call.1} parent=1 // pred_check_branch
      %19 = sbr.rel (0) target = $region9
    $region8: #{tpu_custom_call.1} parent=1 // pred_region
      %20 = dma.done [#allocation3], 256
    $region9: #{tpu_custom_call.1} parent=1 // pred_fallthru
      _
    %v21 = vld [vmem:[#allocation2] sm:$0xff]
    %v22 = vld [vmem:[#allocation2 + $0x8] sm:$0xff]
    %v23 = vxor.u32 %v21, 2147483648
    %v24 = vxor.u32 %v22, 2147483648
    %v25 = vmul.f32 %v23, 1.442695
    %v26 = vpow.pop %v25
    %v27 = vmul.f32 %v24, 1.442695
    %v28 = vpow.pop %v27
    %v29 = vadd.f32 %v26, 1.0
    %v30 = vadd.f32 %v28, 1.0
    %v31 = vrcp.pop %v29
    %v32 = vmul.f32 1.0, %v31
    %v33 = vrcp.pop %v30
    %v34 = vmul.f32 1.0, %v33
    %35 = vst [vmem:[#allocation5] sm:$0xff] %v32
    %36 = vst [vmem:[#allocation5 + $0x8] sm:$0xff] %v34
    // Predicated region
    $region10: #{tpu_custom_call.1} parent=1 // pred_check
      _
    $region11: #{tpu_custom_call.1} parent=1 // pred_check_branch
      %38 = sbr.rel (0) target = $region13
    $region12: #{tpu_custom_call.1} parent=1 // pred_region
      %s40 = ssub.s32 256, 256
      %41 = vsyncadd [#allocation4], %s40
      %s43 = sshll.u32 [#allocation5], 4
      %s44 = int_to_ptr.vmem [resolvable:$true] %s43
      %46 = dma.vmem_to_hbm [thread:$0]  %s44, 256, %s1, [#allocation4]
    $region13: #{tpu_custom_call.1} parent=1 // pred_fallthru
      _
    // Predicated region
    $region14: #{tpu_custom_call.1} parent=1 // pred_check
      _
    $region15: #{tpu_custom_call.1} parent=1 // pred_check_branch
      %48 = sbr.rel (0) target = $region17
    $region16: #{tpu_custom_call.1} parent=1 // pred_region
      %49 = dma.done [#allocation4], 256
    $region17: #{tpu_custom_call.1} parent=1 // pred_fallthru
      _
    %50 = vsyncpa [#allocation3], 1
    %51 = vsyncpa [#allocation4], 1

</llo_original>
